<compile_context>
chip_gen: v7x
topology: tpu7x:2x2x1
jax: 0.10.0
libtpu: 0.0.40
codegen_flags: <defaults>
</compile_context>

<pallas_src>
import functools

import jax
import jax.numpy as jnp
from jax import lax
from jax.experimental import pallas as pl
from jax.experimental.pallas import tpu as pltpu

EPS = 1e-5


def _attention_kernel(x_ref, wfc_ref, bfc_ref, wff_ref, bff_ref, o_ref,
                      *, bt, L, D, heads, hd):
    rows = bt * L
    x2 = x_ref[...].reshape(rows, D)                                  # [rows, D] f32

    # qkv = swish(x @ Wfc + bfc): bf16 MXU operands, f32 accumulation / post-math.
    qkv = jnp.dot(x2.astype(jnp.bfloat16), wfc_ref[...],
                  preferred_element_type=jnp.float32) + bfc_ref[...]
    qkv = qkv * jax.nn.sigmoid(qkv)                                   # swish (f32, EUP)

    # Per-head attention; fcfc is applied as a split-K matmul inside the unrolled loop:
    #   sum_h nv_h @ Wff[h*hd:(h+1)*hd, :] == concat_h(nv_h) @ Wff
    acc = jnp.zeros((rows, D), jnp.float32)
    for h in range(heads):
        base = h * 3 * hd
        q_h = qkv[:, base:base + hd].reshape(bt, L, hd).astype(jnp.bfloat16)
        k_h = qkv[:, base + hd:base + 2 * hd].reshape(bt, L, hd).astype(jnp.bfloat16)
        v_h = qkv[:, base + 2 * hd:base + 3 * hd].reshape(bt, L, hd).astype(jnp.bfloat16)

        s = jnp.einsum('bwd,bmd->bwm', q_h, k_h,
                       preferred_element_type=jnp.float32)            # [bt, L, L]
        s = s - jnp.max(s, axis=-1, keepdims=True)                    # stable softmax
        e = jnp.exp(s)
        att = e / jnp.sum(e, axis=-1, keepdims=True)                  # f32

        nv_h = jnp.einsum('bwm,bmd->bwd', att.astype(jnp.bfloat16), v_h,
                          preferred_element_type=jnp.float32)         # [bt, L, hd]

        acc = acc + jnp.dot(nv_h.reshape(rows, hd).astype(jnp.bfloat16),
                            wff_ref[h * hd:(h + 1) * hd, :],
                            preferred_element_type=jnp.float32)

    m = acc + bff_ref[...]
    m = m * jax.nn.sigmoid(m)                                         # swish (f32)
    y = m + x2                                                        # residual

    # layer_norm over the last dim (no affine, eps=1e-5); fused one-pass stats.
    inv_d = 1.0 / D
    mean = jnp.sum(y, axis=-1, keepdims=True) * inv_d
    var = jnp.sum(y * y, axis=-1, keepdims=True) * inv_d - mean * mean
    out = (y - mean) * lax.rsqrt(var + EPS)

    o_ref[...] = out.reshape(bt, L, D).astype(o_ref.dtype)


def attention_forward(x, wfc, bfc, wff, bff, *, heads, hd, batch_tile=None):
    """x: [B, L, dims] f32; wfc: [dims, heads*hd*3]; wff: [heads*hd, dims]."""
    B, L, D = x.shape
    F = 3 * heads * hd
    HD = heads * hd

    if batch_tile is None:
        # Largest divisor of B keeping ~<=256 rows per grid step.
        batch_tile = 1
        for bt in range(1, B + 1):
            if B % bt == 0 and bt * L <= 256:
                batch_tile = bt
    assert B % batch_tile == 0
    grid = (B // batch_tile,)

    kernel = functools.partial(_attention_kernel,
                               bt=batch_tile, L=L, D=D, heads=heads, hd=hd)

    return pl.pallas_call(
        kernel,
        out_shape=jax.ShapeDtypeStruct((B, L, D), jnp.float32),
        grid_spec=pltpu.PrefetchScalarGridSpec(
            num_scalar_prefetch=0,
            grid=grid,
            in_specs=[
                pl.BlockSpec((batch_tile, L, D), lambda i: (i, 0, 0)),  # x tile
                pl.BlockSpec((D, F), lambda i: (0, 0)),                 # Wfc (resident)
                pl.BlockSpec((1, F), lambda i: (0, 0)),                 # bfc
                pl.BlockSpec((HD, D), lambda i: (0, 0)),                # Wff (resident)
                pl.BlockSpec((1, D), lambda i: (0, 0)),                 # bff
            ],
            out_specs=pl.BlockSpec((batch_tile, L, D), lambda i: (i, 0, 0)),
        ),
        compiler_params=pltpu.CompilerParams(
            dimension_semantics=("parallel",)),
    )(x,
      wfc.astype(jnp.bfloat16), bfc.reshape(1, -1).astype(jnp.float32),
      wff.astype(jnp.bfloat16), bff.reshape(1, -1).astype(jnp.float32))


def make_params(key, dims, heads, hd, dtype=jnp.float32):
    """Deterministic torch-Linear-style params, stored as [in, out] (pre-transposed)."""
    k1, k2, k3, k4 = jax.random.split(key, 4)
    b1 = float(dims) ** -0.5
    wfc = jax.random.uniform(k1, (dims, heads * hd * 3), dtype, -b1, b1)
    bfc = jax.random.uniform(k2, (heads * hd * 3,), dtype, -b1, b1)
    b2 = float(heads * hd) ** -0.5
    wff = jax.random.uniform(k3, (heads * hd, dims), dtype, -b2, b2)
    bff = jax.random.uniform(k4, (dims,), dtype, -b2, b2)
    return wfc, bfc, wff, bff


def ref_forward(x, wfc, bfc, wff, bff, heads, hd):
    """Pure-JAX reference with the same (bf16 matmul / f32 accumulate) precision."""
    B, L, D = x.shape
    x2 = x.reshape(B * L, D)
    qkv = jnp.dot(x2.astype(jnp.bfloat16), wfc.astype(jnp.bfloat16),
                  preferred_element_type=jnp.float32) + bfc[None, :]
    qkv = qkv * jax.nn.sigmoid(qkv)
    qkv = qkv.reshape(B, L, heads, 3 * hd)
    q, k, v = qkv[..., :hd], qkv[..., hd:2 * hd], qkv[..., 2 * hd:]
    s = jnp.einsum('bwhd,bmhd->bhwm', q.astype(jnp.bfloat16), k.astype(jnp.bfloat16),
                   preferred_element_type=jnp.float32)
    att = jax.nn.softmax(s, axis=-1)
    nv = jnp.einsum('bhwm,bmhd->bwhd', att.astype(jnp.bfloat16), v.astype(jnp.bfloat16),
                    preferred_element_type=jnp.float32).reshape(B * L, heads * hd)
    m = jnp.dot(nv.astype(jnp.bfloat16), wff.astype(jnp.bfloat16),
                preferred_element_type=jnp.float32) + bff[None, :]
    m = m * jax.nn.sigmoid(m)
    y = m + x2
    mean = jnp.mean(y, axis=-1, keepdims=True)
    var = jnp.mean((y - mean) ** 2, axis=-1, keepdims=True)
    return ((y - mean) * lax.rsqrt(var + EPS)).reshape(B, L, D)


if __name__ == "__main__":
    key = jax.random.PRNGKey(0)
    B, L, dims, heads, hd = 2, 8, 128, 2, 64   # lane-dense: dims = heads*hd = 128

    kx, kp = jax.random.split(key)
    x = jax.random.normal(kx, (B, L, dims), dtype=jnp.float32)
    wfc, bfc, wff, bff = make_params(kp, dims, heads, hd)

    # batch_tile=1 exercises the multi-step grid (one batch element per step).
    out = attention_forward(x, wfc, bfc, wff, bff, heads=heads, hd=hd, batch_tile=1)
    jax.block_until_ready(out)

    ref = ref_forward(x, wfc, bfc, wff, bff, heads, hd)
    assert out.shape == (B, L, dims)
    assert jnp.allclose(out, ref, atol=1e-3, rtol=1e-3), float(jnp.max(jnp.abs(out - ref)))

    print("KERNEL_OK")
</pallas_src>

<mosaic_0001>
module attributes {stable_mosaic.version = 11 : i64} {
  func.func @_attention_kernel(%arg0: i32, %arg1: memref<1x8x128xf32, #tpu.memory_space<vmem>>, %arg2: memref<128x384xbf16, #tpu.memory_space<vmem>>, %arg3: memref<1x384xf32, #tpu.memory_space<vmem>>, %arg4: memref<128x128xbf16, #tpu.memory_space<vmem>>, %arg5: memref<1x128xf32, #tpu.memory_space<vmem>>, %arg6: memref<1x8x128xf32, #tpu.memory_space<vmem>>) attributes {dimension_semantics = [#tpu.dimension_semantics<parallel>], iteration_bounds = array<i64: 2>, scalar_prefetch = 0 : i64, scratch_operands = 0 : i64, tpu.core_type = #tpu.core_type<tc>, window_params = [{transform_indices = @transform_0, window_bounds = array<i64: 1, 8, 128>}, {pipeline_mode = #tpu.pipeline_mode<synchronous>, transform_indices = @transform_1, window_bounds = array<i64: 128, 384>}, {pipeline_mode = #tpu.pipeline_mode<synchronous>, transform_indices = @transform_2, window_bounds = array<i64: 1, 384>}, {pipeline_mode = #tpu.pipeline_mode<synchronous>, transform_indices = @transform_3, window_bounds = array<i64: 128, 128>}, {pipeline_mode = #tpu.pipeline_mode<synchronous>, transform_indices = @transform_4, window_bounds = array<i64: 1, 128>}, {transform_indices = @transform_5, window_bounds = array<i64: 1, 8, 128>}]} {
    %c0 = arith.constant 0 : index
    %c0_0 = arith.constant 0 : index
    %c0_1 = arith.constant 0 : index
    %0 = vector.load %arg1[%c0, %c0_0, %c0_1] : memref<1x8x128xf32, #tpu.memory_space<vmem>>, vector<1x8x128xf32>
    %1 = vector.shape_cast %0 : vector<1x8x128xf32> to vector<8x128xf32>
    %2 = arith.truncf %1 : vector<8x128xf32> to vector<8x128xbf16>
    %c0_2 = arith.constant 0 : index
    %c0_3 = arith.constant 0 : index
    %3 = vector.load %arg2[%c0_2, %c0_3] : memref<128x384xbf16, #tpu.memory_space<vmem>>, vector<128x384xbf16>
    %cst = arith.constant dense<0.000000e+00> : vector<8x384xf32>
    %4 = tpu.matmul %2, %3, %cst {dimension_numbers = #tpu.dot_dimension_numbers<[1], [0], [0], [1], [0, 0, 1, 1], [], []>} : vector<8x128xbf16>, vector<128x384xbf16>, vector<8x384xf32> -> vector<8x384xf32>
    %c0_4 = arith.constant 0 : index
    %c0_5 = arith.constant 0 : index
    %5 = vector.load %arg3[%c0_4, %c0_5] : memref<1x384xf32, #tpu.memory_space<vmem>>, vector<1x384xf32>
    %6 = vector.broadcast %5 : vector<1x384xf32> to vector<8x384xf32>
    %7 = arith.addf %4, %6 : vector<8x384xf32>
    %8 = arith.negf %7 : vector<8x384xf32>
    %9 = math.exp %8 : vector<8x384xf32>
    %cst_6 = arith.constant 1.000000e+00 : f32
    %10 = vector.broadcast %cst_6 : f32 to vector<8x384xf32>
    %11 = arith.addf %10, %9 : vector<8x384xf32>
    %12 = arith.divf %10, %11 : vector<8x384xf32>
    %13 = arith.mulf %7, %12 : vector<8x384xf32>
    %cst_7 = arith.constant 0.000000e+00 : f32
    %14 = vector.broadcast %cst_7 : f32 to vector<8x128xf32>
    %15 = vector.extract_strided_slice %13 {offsets = [0, 0], sizes = [8, 64], strides = [1, 1]} : vector<8x384xf32> to vector<8x64xf32>
    %16 = vector.shape_cast %15 : vector<8x64xf32> to vector<1x8x64xf32>
    %17 = arith.truncf %16 : vector<1x8x64xf32> to vector<1x8x64xbf16>
    %18 = vector.extract_strided_slice %13 {offsets = [0, 64], sizes = [8, 64], strides = [1, 1]} : vector<8x384xf32> to vector<8x64xf32>
    %19 = vector.shape_cast %18 : vector<8x64xf32> to vector<1x8x64xf32>
    %20 = arith.truncf %19 : vector<1x8x64xf32> to vector<1x8x64xbf16>
    %21 = vector.extract_strided_slice %13 {offsets = [0, 128], sizes = [8, 64], strides = [1, 1]} : vector<8x384xf32> to vector<8x64xf32>
    %22 = vector.shape_cast %21 : vector<8x64xf32> to vector<1x8x64xf32>
    %23 = arith.truncf %22 : vector<1x8x64xf32> to vector<1x8x64xbf16>
    "tpu.trace_start"() <{level = 10 : i32, message = "bwd,bmd->bwm"}> : () -> ()
    %cst_8 = arith.constant dense<0.000000e+00> : vector<1x8x8xf32>
    %24 = tpu.matmul %17, %20, %cst_8 {dimension_numbers = #tpu.dot_dimension_numbers<[2], [2], [1], [1], [0, 0, 0, 1, 1, 1], [0], [0]>} : vector<1x8x64xbf16>, vector<1x8x64xbf16>, vector<1x8x8xf32> -> vector<1x8x8xf32>
    "tpu.trace_stop"() : () -> ()
    %cst_9 = arith.constant dense<0xFF800000> : vector<1x8xf32>
    %25 = vector.multi_reduction <maximumf>, %24, %cst_9 [2] : vector<1x8x8xf32> to vector<1x8xf32>
    %26 = vector.shape_cast %25 : vector<1x8xf32> to vector<1x8x1xf32>
    %27 = vector.broadcast %26 : vector<1x8x1xf32> to vector<1x8x8xf32>
    %28 = arith.subf %24, %27 : vector<1x8x8xf32>
    %29 = math.exp %28 : vector<1x8x8xf32>
    %cst_10 = arith.constant dense<0.000000e+00> : vector<1x8xf32>
    %30 = vector.multi_reduction <add>, %29, %cst_10 [2] : vector<1x8x8xf32> to vector<1x8xf32>
    %31 = vector.shape_cast %30 : vector<1x8xf32> to vector<1x8x1xf32>
    %32 = vector.broadcast %31 : vector<1x8x1xf32> to vector<1x8x8xf32>
    %33 = arith.divf %29, %32 : vector<1x8x8xf32>
    %34 = arith.truncf %33 : vector<1x8x8xf32> to vector<1x8x8xbf16>
    "tpu.trace_start"() <{level = 10 : i32, message = "bwm,bmd->bwd"}> : () -> ()
    %cst_11 = arith.constant dense<0.000000e+00> : vector<1x8x64xf32>
    %35 = tpu.matmul %34, %23, %cst_11 {dimension_numbers = #tpu.dot_dimension_numbers<[2], [1], [1], [2], [0, 0, 0, 1, 1, 2], [0], [0]>} : vector<1x8x8xbf16>, vector<1x8x64xbf16>, vector<1x8x64xf32> -> vector<1x8x64xf32>
    "tpu.trace_stop"() : () -> ()
    %36 = vector.shape_cast %35 : vector<1x8x64xf32> to vector<8x64xf32>
    %37 = arith.truncf %36 : vector<8x64xf32> to vector<8x64xbf16>
    %c0_12 = arith.constant 0 : index
    %c0_13 = arith.constant 0 : index
    %38 = vector.load %arg4[%c0_12, %c0_13] : memref<128x128xbf16, #tpu.memory_space<vmem>>, vector<64x128xbf16>
    %cst_14 = arith.constant dense<0.000000e+00> : vector<8x128xf32>
    %39 = tpu.matmul %37, %38, %cst_14 {dimension_numbers = #tpu.dot_dimension_numbers<[1], [0], [0], [1], [0, 0, 1, 1], [], []>} : vector<8x64xbf16>, vector<64x128xbf16>, vector<8x128xf32> -> vector<8x128xf32>
    %40 = arith.addf %14, %39 : vector<8x128xf32>
    %41 = vector.extract_strided_slice %13 {offsets = [0, 192], sizes = [8, 64], strides = [1, 1]} : vector<8x384xf32> to vector<8x64xf32>
    %42 = vector.shape_cast %41 : vector<8x64xf32> to vector<1x8x64xf32>
    %43 = arith.truncf %42 : vector<1x8x64xf32> to vector<1x8x64xbf16>
    %44 = vector.extract_strided_slice %13 {offsets = [0, 256], sizes = [8, 64], strides = [1, 1]} : vector<8x384xf32> to vector<8x64xf32>
    %45 = vector.shape_cast %44 : vector<8x64xf32> to vector<1x8x64xf32>
    %46 = arith.truncf %45 : vector<1x8x64xf32> to vector<1x8x64xbf16>
    %47 = vector.extract_strided_slice %13 {offsets = [0, 320], sizes = [8, 64], strides = [1, 1]} : vector<8x384xf32> to vector<8x64xf32>
    %48 = vector.shape_cast %47 : vector<8x64xf32> to vector<1x8x64xf32>
    %49 = arith.truncf %48 : vector<1x8x64xf32> to vector<1x8x64xbf16>
    "tpu.trace_start"() <{level = 10 : i32, message = "bwd,bmd->bwm"}> : () -> ()
    %cst_15 = arith.constant dense<0.000000e+00> : vector<1x8x8xf32>
    %50 = tpu.matmul %43, %46, %cst_15 {dimension_numbers = #tpu.dot_dimension_numbers<[2], [2], [1], [1], [0, 0, 0, 1, 1, 1], [0], [0]>} : vector<1x8x64xbf16>, vector<1x8x64xbf16>, vector<1x8x8xf32> -> vector<1x8x8xf32>
    "tpu.trace_stop"() : () -> ()
    %cst_16 = arith.constant dense<0xFF800000> : vector<1x8xf32>
    %51 = vector.multi_reduction <maximumf>, %50, %cst_16 [2] : vector<1x8x8xf32> to vector<1x8xf32>
    %52 = vector.shape_cast %51 : vector<1x8xf32> to vector<1x8x1xf32>
    %53 = vector.broadcast %52 : vector<1x8x1xf32> to vector<1x8x8xf32>
    %54 = arith.subf %50, %53 : vector<1x8x8xf32>
    %55 = math.exp %54 : vector<1x8x8xf32>
    %cst_17 = arith.constant dense<0.000000e+00> : vector<1x8xf32>
    %56 = vector.multi_reduction <add>, %55, %cst_17 [2] : vector<1x8x8xf32> to vector<1x8xf32>
    %57 = vector.shape_cast %56 : vector<1x8xf32> to vector<1x8x1xf32>
    %58 = vector.broadcast %57 : vector<1x8x1xf32> to vector<1x8x8xf32>
    %59 = arith.divf %55, %58 : vector<1x8x8xf32>
    %60 = arith.truncf %59 : vector<1x8x8xf32> to vector<1x8x8xbf16>
    "tpu.trace_start"() <{level = 10 : i32, message = "bwm,bmd->bwd"}> : () -> ()
    %cst_18 = arith.constant dense<0.000000e+00> : vector<1x8x64xf32>
    %61 = tpu.matmul %60, %49, %cst_18 {dimension_numbers = #tpu.dot_dimension_numbers<[2], [1], [1], [2], [0, 0, 0, 1, 1, 2], [0], [0]>} : vector<1x8x8xbf16>, vector<1x8x64xbf16>, vector<1x8x64xf32> -> vector<1x8x64xf32>
    "tpu.trace_stop"() : () -> ()
    %62 = vector.shape_cast %61 : vector<1x8x64xf32> to vector<8x64xf32>
    %63 = arith.truncf %62 : vector<8x64xf32> to vector<8x64xbf16>
    %c64 = arith.constant 64 : index
    %c0_19 = arith.constant 0 : index
    %64 = vector.load %arg4[%c64, %c0_19] : memref<128x128xbf16, #tpu.memory_space<vmem>>, vector<64x128xbf16>
    %cst_20 = arith.constant dense<0.000000e+00> : vector<8x128xf32>
    %65 = tpu.matmul %63, %64, %cst_20 {dimension_numbers = #tpu.dot_dimension_numbers<[1], [0], [0], [1], [0, 0, 1, 1], [], []>} : vector<8x64xbf16>, vector<64x128xbf16>, vector<8x128xf32> -> vector<8x128xf32>
    %66 = arith.addf %40, %65 : vector<8x128xf32>
    %c0_21 = arith.constant 0 : index
    %c0_22 = arith.constant 0 : index
    %67 = vector.load %arg5[%c0_21, %c0_22] : memref<1x128xf32, #tpu.memory_space<vmem>>, vector<1x128xf32>
    %68 = vector.broadcast %67 : vector<1x128xf32> to vector<8x128xf32>
    %69 = arith.addf %66, %68 : vector<8x128xf32>
    %70 = arith.negf %69 : vector<8x128xf32>
    %71 = math.exp %70 : vector<8x128xf32>
    %cst_23 = arith.constant 1.000000e+00 : f32
    %72 = vector.broadcast %cst_23 : f32 to vector<8x128xf32>
    %73 = arith.addf %72, %71 : vector<8x128xf32>
    %74 = arith.divf %72, %73 : vector<8x128xf32>
    %75 = arith.mulf %69, %74 : vector<8x128xf32>
    %76 = arith.addf %75, %1 : vector<8x128xf32>
    %cst_24 = arith.constant dense<0.000000e+00> : vector<8xf32>
    %77 = vector.multi_reduction <add>, %76, %cst_24 [1] : vector<8x128xf32> to vector<8xf32>
    %78 = vector.shape_cast %77 : vector<8xf32> to vector<8x1xf32>
    %cst_25 = arith.constant 7.812500e-03 : f32
    %79 = vector.broadcast %cst_25 : f32 to vector<8x1xf32>
    %80 = arith.mulf %78, %79 : vector<8x1xf32>
    %81 = arith.mulf %76, %76 : vector<8x128xf32>
    %cst_26 = arith.constant dense<0.000000e+00> : vector<8xf32>
    %82 = vector.multi_reduction <add>, %81, %cst_26 [1] : vector<8x128xf32> to vector<8xf32>
    %83 = vector.shape_cast %82 : vector<8xf32> to vector<8x1xf32>
    %cst_27 = arith.constant 7.812500e-03 : f32
    %84 = vector.broadcast %cst_27 : f32 to vector<8x1xf32>
    %85 = arith.mulf %83, %84 : vector<8x1xf32>
    %86 = arith.mulf %80, %80 : vector<8x1xf32>
    %87 = arith.subf %85, %86 : vector<8x1xf32>
    %88 = vector.broadcast %80 : vector<8x1xf32> to vector<8x128xf32>
    %89 = arith.subf %76, %88 : vector<8x128xf32>
    %cst_28 = arith.constant 9.99999974E-6 : f32
    %90 = vector.broadcast %cst_28 : f32 to vector<8x1xf32>
    %91 = arith.addf %87, %90 : vector<8x1xf32>
    %92 = math.rsqrt %91 : vector<8x1xf32>
    %93 = vector.broadcast %92 : vector<8x1xf32> to vector<8x128xf32>
    %94 = arith.mulf %89, %93 : vector<8x128xf32>
    %95 = vector.shape_cast %94 : vector<8x128xf32> to vector<1x8x128xf32>
    %c0_29 = arith.constant 0 : index
    %c0_30 = arith.constant 0 : index
    %c0_31 = arith.constant 0 : index
    %96 = vector.load %arg6[%c0_29, %c0_30, %c0_31] : memref<1x8x128xf32, #tpu.memory_space<vmem>>, vector<1x8x128xf32>
    tpu.vector_store %arg6[%c0_29, %c0_30, %c0_31], %95 {strides = array<i32>} : memref<1x8x128xf32, #tpu.memory_space<vmem>>, vector<1x8x128xf32>,
    return
  }
  func.func @transform_0(%arg0: i32) -> (i32, i32, i32) {
    %c0_i32 = arith.constant 0 : i32
    %c0_i32_0 = arith.constant 0 : i32
    %c0_i32_1 = arith.constant 0 : i32
    return %arg0, %c0_i32, %c0_i32_0 : i32, i32, i32
  }
  func.func @transform_1(%arg0: i32) -> (i32, i32) {
    %c0_i32 = arith.constant 0 : i32
    %c0_i32_0 = arith.constant 0 : i32
    %c0_i32_1 = arith.constant 0 : i32
    return %c0_i32, %c0_i32_0 : i32, i32
  }
  func.func @transform_2(%arg0: i32) -> (i32, i32) {
    %c0_i32 = arith.constant 0 : i32
    %c0_i32_0 = arith.constant 0 : i32
    %c0_i32_1 = arith.constant 0 : i32
    return %c0_i32, %c0_i32_0 : i32, i32
  }
  func.func @transform_3(%arg0: i32) -> (i32, i32) {
    %c0_i32 = arith.constant 0 : i32
    %c0_i32_0 = arith.constant 0 : i32
    %c0_i32_1 = arith.constant 0 : i32
    return %c0_i32, %c0_i32_0 : i32, i32
  }
  func.func @transform_4(%arg0: i32) -> (i32, i32) {
    %c0_i32 = arith.constant 0 : i32
    %c0_i32_0 = arith.constant 0 : i32
    %c0_i32_1 = arith.constant 0 : i32
    return %c0_i32, %c0_i32_0 : i32, i32
  }
  func.func @transform_5(%arg0: i32) -> (i32, i32, i32) {
    %c0_i32 = arith.constant 0 : i32
    %c0_i32_0 = arith.constant 0 : i32
    %c0_i32_1 = arith.constant 0 : i32
    return %arg0, %c0_i32, %c0_i32_0 : i32, i32, i32
  }
}

</mosaic_0001>

<llo_original>
// kernel: tpu_custom_call.1
$region0: #{tpu_custom_call.1}
  #allocation0 [shape = 'u32[]', space=smem, size = 0x4, offset = 0x4, fixed_abs, tag = 'smem constant byte address 0x4 - core index']
  #allocation1 [shape = 'u32[144,128]{1,0:T(1,128)}', space=vmem, size = 0x12000, scoped, tag = 'internal scratch']
  %s0 = inlined_call_operand.hbm [shape: f32[2,8,128], index: 0, kind: input, shape index: {}]
  %s1 = inlined_call_operand.hbm [shape: bf16[128,384], index: 1, kind: input, shape index: {}]
  %s2 = inlined_call_operand.vmem [shape: f32[1,384], index: 2, kind: input, shape index: {}]
  %s3 = inlined_call_operand.hbm [shape: bf16[128,128], index: 3, kind: input, shape index: {}]
  %s4 = inlined_call_operand.vmem [shape: f32[1,128], index: 4, kind: input, shape index: {}]
  %s5 = inlined_call_operand.hbm [shape: f32[2,8,128], index: 5, kind: output, shape index: {}]
  %s6 = sld [smem:[#allocation0]]
  $region65: #{tpu_custom_call.1} parent=0
    _
  %s8 = ssub.s32 1, %s6
  %s9 = scalar_select 0, %s8, %s6
  $region1: #{tpu_custom_call.1} parent=0
    #allocation2 [shape = 'u8[8192]{0}', space=vmem, size = 0x2000, scoped, tag = 'input window, operand 0']
    #allocation3 [shape = 's32[2]{0}', space=sflag, size = 0x8, scoped, tag = 'scoped memory for tpu_custom_call.1']
    #allocation4 [shape = 's32[2]{0}', space=sflag, size = 0x8, scoped, tag = 'scoped memory for tpu_custom_call.1']
    #allocation5 [shape = 'u8[98304]{0}', space=vmem, size = 0x18000, scoped, tag = 'input window, operand 1, single buffered']
    #allocation6 [shape = 's32[1]{0}', space=sflag, size = 0x4, scoped, tag = 'scoped memory for tpu_custom_call.1']
    #allocation7 [shape = 'u8[32768]{0}', space=vmem, size = 0x8000, scoped, tag = 'input window, operand 3, single buffered']
    #allocation8 [shape = 'u8[8192]{0}', space=vmem, size = 0x2000, scoped, tag = 'output window, operand 0']
    %10 = vsyncpa [#allocation3], 0
    %s11 = scalar_lea.sflag [#allocation3], 1
    %12 = vsyncpa %s11, 0
    %13 = vsyncpa [#allocation6], 0
    %14 = vsyncpa [#allocation4], 0
    %s15 = scalar_lea.sflag [#allocation4], 1
    %16 = vsyncpa %s15, 0
    loop: start=0, step=1, limit=4
    $region2: #{tpu_custom_call.1} parent=1 // loop_pre_header
      _
    $region3: #{tpu_custom_call.1} parent=1 // loop_header
      %s18 = sphi 0, %s22
      %p19 = scmp.ge.s32.totalorder %s18, 4
      %s28 = sphi 0, %s30
      %s31 = sphi 0, %s28
      %s32 = sphi 0, %s31
      %s48 = sphi 0, %s32
      %s52 = sphi 0, %s52
      %s54 = sphi 0, %s52
      %s55 = sphi 0, %s54
      %s69 = sphi 0, %s55
      %s73 = sphi 0, %s73
      %s75 = sphi 0, %s73
      %s76 = sphi 0, %s75
      %s90 = sphi 0, %s76
      %s94 = sphi 0, %s94
      %s96 = sphi 0, %s94
      %s97 = sphi 0, %s96
      %s111 = sphi 0, %s97
      %s115 = sphi 0, %s115
      %s117 = sphi 0, %s115
      %s118 = sphi 0, %s117
      %s132 = sphi 0, %s118
      %s138 = sphi 0, %s140
      %s141 = sphi 0, %s138
      %s142 = sphi 0, %s141
      %s158 = sphi 0, %s142
    $region4: #{tpu_custom_call.1} parent=1 // loop_header_branch
      %21 = sbr.rel (%p19) target = $region8
    $region5: #{tpu_custom_call.1} parent=1 // loop_body
      %s23 = ssub.s32 %s18, 1
      %s24 = ssub.s32 %s18, 2
      %s25 = sadd.s32 %s18, 1
      %s26 = ssub.s32 %s18, %s25
      %p27 = scmp.eq.s32.totalorder %s26, 0
      %s29 = sadd.s32 %s28, 1
      %s30 = scalar_select %p27, %s28, %s29
      %p33 = pneg %p27
      %p34 = scmp.eq.s32.totalorder %s18, 1
      %p35 = por %p33, %p34
      %p36 = scmp.ne.s32.totalorder %s28, %s31
      %p37 = scmp.eq.s32.totalorder %s18, 0
      %p38 = por %p36, %p37
      %p39 = scmp.ne.s32.totalorder %s28, %s31
      %p40 = scmp.eq.s32.totalorder %s23, 1
      %p41 = por %p39, %p40
      %p42 = scmp.ne.s32.totalorder %s31, %s32
      %p43 = scmp.eq.s32.totalorder %s23, 0
      %p44 = por %p42, %p43
      %p45 = scmp.ne.s32.totalorder %s31, %s32
      %p46 = scmp.eq.s32.totalorder %s24, 1
      %p47 = por %p45, %p46
      %p49 = scmp.ne.s32.totalorder %s32, %s48
      %p50 = scmp.eq.s32.totalorder %s24, 0
      %p51 = por %p49, %p50
      %s53 = sadd.s32 %s52, 1
      %p56 = scmp.eq.s32.totalorder %s18, 1
      %p57 = scmp.ne.s32.totalorder %s52, %s54
      %p58 = scmp.eq.s32.totalorder %s18, 0
      %p59 = por %p57, %p58
      %p60 = scmp.ne.s32.totalorder %s52, %s54
      %p61 = scmp.eq.s32.totalorder %s23, 1
      %p62 = por %p60, %p61
      %p63 = scmp.ne.s32.totalorder %s54, %s55
      %p64 = scmp.eq.s32.totalorder %s23, 0
      %p65 = por %p63, %p64
      %p66 = scmp.ne.s32.totalorder %s54, %s55
      %p67 = scmp.eq.s32.totalorder %s24, 1
      %p68 = por %p66, %p67
      %p70 = scmp.ne.s32.totalorder %s55, %s69
      %p71 = scmp.eq.s32.totalorder %s24, 0
      %p72 = por %p70, %p71
      %s74 = sadd.s32 %s73, 1
      %p77 = scmp.eq.s32.totalorder %s18, 1
      %p78 = scmp.ne.s32.totalorder %s73, %s75
      %p79 = scmp.eq.s32.totalorder %s18, 0
      %p80 = por %p78, %p79
      %p81 = scmp.ne.s32.totalorder %s73, %s75
      %p82 = scmp.eq.s32.totalorder %s23, 1
      %p83 = por %p81, %p82
      %p84 = scmp.ne.s32.totalorder %s75, %s76
      %p85 = scmp.eq.s32.totalorder %s23, 0
      %p86 = por %p84, %p85
      %p87 = scmp.ne.s32.totalorder %s75, %s76
      %p88 = scmp.eq.s32.totalorder %s24, 1
      %p89 = por %p87, %p88
      %p91 = scmp.ne.s32.totalorder %s76, %s90
      %p92 = scmp.eq.s32.totalorder %s24, 0
      %p93 = por %p91, %p92
      %s95 = sadd.s32 %s94, 1
      %p98 = scmp.eq.s32.totalorder %s18, 1
      %p99 = scmp.ne.s32.totalorder %s94, %s96
      %p100 = scmp.eq.s32.totalorder %s18, 0
      %p101 = por %p99, %p100
      %p102 = scmp.ne.s32.totalorder %s94, %s96
      %p103 = scmp.eq.s32.totalorder %s23, 1
      %p104 = por %p102, %p103
      %p105 = scmp.ne.s32.totalorder %s96, %s97
      %p106 = scmp.eq.s32.totalorder %s23, 0
      %p107 = por %p105, %p106
      %p108 = scmp.ne.s32.totalorder %s96, %s97
      %p109 = scmp.eq.s32.totalorder %s24, 1
      %p110 = por %p108, %p109
      %p112 = scmp.ne.s32.totalorder %s97, %s111
      %p113 = scmp.eq.s32.totalorder %s24, 0
      %p114 = por %p112, %p113
      %s116 = sadd.s32 %s115, 1
      %p119 = scmp.eq.s32.totalorder %s18, 1
      %p120 = scmp.ne.s32.totalorder %s115, %s117
      %p121 = scmp.eq.s32.totalorder %s18, 0
      %p122 = por %p120, %p121
      %p123 = scmp.ne.s32.totalorder %s115, %s117
      %p124 = scmp.eq.s32.totalorder %s23, 1
      %p125 = por %p123, %p124
      %p126 = scmp.ne.s32.totalorder %s117, %s118
      %p127 = scmp.eq.s32.totalorder %s23, 0
      %p128 = por %p126, %p127
      %p129 = scmp.ne.s32.totalorder %s117, %s118
      %p130 = scmp.eq.s32.totalorder %s24, 1
      %p131 = por %p129, %p130
      %p133 = scmp.ne.s32.totalorder %s118, %s132
      %p134 = scmp.eq.s32.totalorder %s24, 0
      %p135 = por %p133, %p134
      %s136 = ssub.s32 %s18, %s25
      %p137 = scmp.eq.s32.totalorder %s136, 0
      %s139 = sadd.s32 %s138, 1
      %s140 = scalar_select %p137, %s138, %s139
      %p143 = pneg %p137
      %p144 = scmp.eq.s32.totalorder %s18, 1
      %p145 = por %p143, %p144
      %p146 = scmp.ne.s32.totalorder %s138, %s141
      %p147 = scmp.eq.s32.totalorder %s18, 0
      %p148 = por %p146, %p147
      %p149 = scmp.ne.s32.totalorder %s138, %s141
      %p150 = scmp.eq.s32.totalorder %s23, 1
      %p151 = por %p149, %p150
      %p152 = scmp.ne.s32.totalorder %s141, %s142
      %p153 = scmp.eq.s32.totalorder %s23, 0
      %p154 = por %p152, %p153
      %p155 = scmp.ne.s32.totalorder %s141, %s142
      %p156 = scmp.eq.s32.totalorder %s24, 1
      %p157 = por %p155, %p156
      %p159 = scmp.ne.s32.totalorder %s142, %s158
      %p160 = scmp.eq.s32.totalorder %s24, 0
      %p161 = por %p159, %p160
      %p162 = scmp.le.s32.totalorder 1, %s18
      %p163 = scmp.lt.s32.totalorder %s18, 3
      %p164 = pnand %p162, %p163
      %p165 = pneg %p164
      // Predicated region
      $region9: #{tpu_custom_call.1} parent=5 // pred_check
        _
      $region10: #{tpu_custom_call.1} parent=5 // pred_check_branch
        %167 = sbr.rel (%p164) target = $region12
      $region11: #{tpu_custom_call.1} parent=5 // pred_region
        %s168 = ssub.s32 %s18, 1
        // Predicated region
        $region13: #{tpu_custom_call.1} parent=11 // pred_check
          %p169 = pneg %p65
        $region14: #{tpu_custom_call.1} parent=11 // pred_check_branch
          %171 = sbr.rel (%p169) target = $region16
        $region15: #{tpu_custom_call.1} parent=11 // pred_region
          %s173 = ssub.s32 3072, 3072
          %174 = vsyncadd [#allocation6], %s173
          %s175 = sshll.u32 [#allocation5], 4
          %s176 = int_to_ptr.vmem [resolvable:$true] %s175
          %181 = dma.hbm_to_vmem [thread:$0]  %s1, 3072, %s176, [#allocation6], 192, 192, 12
        $region16: #{tpu_custom_call.1} parent=11 // pred_fallthru
          _
        // Predicated region
        $region17: #{tpu_custom_call.1} parent=11 // pred_check
          %p182 = pneg %p86
        $region18: #{tpu_custom_call.1} parent=11 // pred_check_branch
          %184 = sbr.rel (%p182) target = $region20
        $region19: #{tpu_custom_call.1} parent=11 // pred_region
          _
        $region20: #{tpu_custom_call.1} parent=11 // pred_fallthru
          _
        // Predicated region
        $region21: #{tpu_custom_call.1} parent=11 // pred_check
          %p185 = pneg %p107
        $region22: #{tpu_custom_call.1} parent=11 // pred_check_branch
          %187 = sbr.rel (%p185) target = $region24
        $region23: #{tpu_custom_call.1} parent=11 // pred_region
          %s189 = ssub.s32 1024, 1024
          %190 = vsyncadd [#allocation6], %s189
          %s191 = sshll.u32 [#allocation7], 4
          %s192 = int_to_ptr.vmem [resolvable:$true] %s191
          %197 = dma.hbm_to_vmem [thread:$0]  %s3, 1024, %s192, [#allocation6], 64, 64, 4
        $region24: #{tpu_custom_call.1} parent=11 // pred_fallthru
          _
        // Predicated region
        $region25: #{tpu_custom_call.1} parent=11 // pred_check
          %p198 = pneg %p128
        $region26: #{tpu_custom_call.1} parent=11 // pred_check_branch
          %200 = sbr.rel (%p198) target = $region28
        $region27: #{tpu_custom_call.1} parent=11 // pred_region
          _
        $region28: #{tpu_custom_call.1} parent=11 // pred_fallthru
          _
      $region12: #{tpu_custom_call.1} parent=5 // pred_fallthru
        _
      %p201 = scmp.lt.s32.totalorder %s18, 2
      // Predicated region
      $region29: #{tpu_custom_call.1} parent=5 // pred_check
        %p202 = pneg %p201
      $region30: #{tpu_custom_call.1} parent=5 // pred_check_branch
        %204 = sbr.rel (%p202) target = $region32
      $region31: #{tpu_custom_call.1} parent=5 // pred_region
        // Predicated region
        $region33: #{tpu_custom_call.1} parent=31 // pred_check
          %p205 = pneg %p38
        $region34: #{tpu_custom_call.1} parent=31 // pred_check_branch
          %207 = sbr.rel (%p205) target = $region36
        $region35: #{tpu_custom_call.1} parent=31 // pred_region
          %s208 = sand.u32 %s28, 1
          %s209 = scalar_lea.sflag [#allocation3], %s208
          %s210 = sand.u32 %s28, 1
          %s211 = smul.addr %s210, 8
          %s212 = scalar_lea.vmem [#allocation2], %s211
          %s214 = ssub.s32 128, 128
          %215 = vsyncadd %s209, %s214
          %s216 = smul.addr %s18, 128
          %s217 = scalar_lea.hbm %s0, %s216
          %s219 = sshll.u32 %s212, 4
          %s220 = int_to_ptr.vmem [resolvable:$true] %s219
          %222 = dma.hbm_to_vmem [thread:$0]  %s217, 128, %s220, %s209
        $region36: #{tpu_custom_call.1} parent=31 // pred_fallthru
          _
      $region32: #{tpu_custom_call.1} parent=5 // pred_fallthru
        _
      %p223 = scmp.le.s32.totalorder 1, %s18
      %p224 = scmp.lt.s32.totalorder %s18, 3
      %p225 = pnand %p223, %p224
      %p226 = pneg %p225
      // Predicated region
      $region37: #{tpu_custom_call.1} parent=5 // pred_check
        _
      $region38: #{tpu_custom_call.1} parent=5 // pred_check_branch
        %228 = sbr.rel (%p225) target = $region40
      $region39: #{tpu_custom_call.1} parent=5 // pred_region
        %s229 = ssub.s32 %s18, 1
        %s230 = sand.u32 %s31, 1
        %s231 = scalar_lea.sflag [#allocation3], %s230
        %s232 = sand.u32 %s31, 1
        %s233 = smul.addr %s232, 8
        %s234 = scalar_lea.vmem [#allocation2], %s233
        // Predicated region
        $region41: #{tpu_custom_call.1} parent=39 // pred_check
          %p235 = pneg %p44
        $region42: #{tpu_custom_call.1} parent=39 // pred_check_branch
          %237 = sbr.rel (%p235) target = $region44
        $region43: #{tpu_custom_call.1} parent=39 // pred_region
          %238 = dma.done %s231, 128
        $region44: #{tpu_custom_call.1} parent=39 // pred_fallthru
          _
        // Predicated region
        $region45: #{tpu_custom_call.1} parent=39 // pred_check
          %p239 = pneg %p65
        $region46: #{tpu_custom_call.1} parent=39 // pred_check_branch
          %241 = sbr.rel (%p239) target = $region48
        $region47: #{tpu_custom_call.1} parent=39 // pred_region
          %242 = dma.done [#allocation6], 3072
        $region48: #{tpu_custom_call.1} parent=39 // pred_fallthru
          _
        // Predicated region
        $region49: #{tpu_custom_call.1} parent=39 // pred_check
          %p243 = pneg %p107
        $region50: #{tpu_custom_call.1} parent=39 // pred_check_branch
          %245 = sbr.rel (%p243) target = $region52
        $region51: #{tpu_custom_call.1} parent=39 // pred_region
          %246 = dma.done [#allocation6], 1024
        $region52: #{tpu_custom_call.1} parent=39 // pred_fallthru
          _
        %s247 = sand.u32 %s31, 1
        %s248 = scalar_lea.sflag [#allocation3], %s247
        %s249 = sand.u32 %s31, 1
        %s250 = smul.addr %s249, 8
        %s251 = scalar_lea.vmem [#allocation2], %s250
        %p252 = pneg %p44
        %p253 = pneg %p41
        %p254 = pneg %p65
        %p255 = pneg %p62
        %p256 = pneg %p86
        %p257 = pneg %p83
        %p258 = pneg %p107
        %p259 = pneg %p104
        %p260 = pneg %p128
        %p261 = pneg %p125
        %p262 = pneg %p154
        %p263 = pneg %p151
        %s264 = sand.u32 %s141, 1
        %s265 = scalar_lea.sflag [#allocation4], %s264
        %s266 = sand.u32 %s141, 1
        %s267 = smul.addr %s266, 8
        %s268 = scalar_lea.vmem [#allocation8], %s267
        %v270 = vld [vmem:[%s234] sm:$0xff]
        %v271 = vpack.c.bf16 %v270, %v270
        %v272 = vld [vmem:[#allocation5] sm:$0xff]
        %v273 = vld [vmem:[#allocation5 + $0x8] sm:$0xf]
        %v274 = vld [vmem:[#allocation5 + $0xc] sm:$0xff]
        %v275 = vld [vmem:[#allocation5 + $0x14] sm:$0xf]
        %v276 = vld [vmem:[#allocation5 + $0x18] sm:$0xff]
        %v277 = vld [vmem:[#allocation5 + $0x20] sm:$0xf]
        %v278 = vld [vmem:[#allocation5 + $0x24] sm:$0xff]
        %v279 = vld [vmem:[#allocation5 + $0x2c] sm:$0xf]
        %v280 = vld [vmem:[#allocation5 + $0x30] sm:$0xff]
        %v281 = vld [vmem:[#allocation5 + $0x38] sm:$0xf]
        %v282 = vld [vmem:[#allocation5 + $0x3c] sm:$0xff]
        %v283 = vld [vmem:[#allocation5 + $0x44] sm:$0xf]
        %v284 = vld [vmem:[#allocation5 + $0x48] sm:$0xff]
        %v285 = vld [vmem:[#allocation5 + $0x50] sm:$0xf]
        %v286 = vld [vmem:[#allocation5 + $0x54] sm:$0xff]
        %v287 = vld [vmem:[#allocation5 + $0x5c] sm:$0xf]
        %v288 = vld [vmem:[#allocation5 + $0x60] sm:$0xff]
        %v289 = vld [vmem:[#allocation5 + $0x68] sm:$0xf]
        %v290 = vld [vmem:[#allocation5 + $0x6c] sm:$0xff]
        %v291 = vld [vmem:[#allocation5 + $0x74] sm:$0xf]
        %v292 = vld [vmem:[#allocation5 + $0x78] sm:$0xff]
        %v293 = vld [vmem:[#allocation5 + $0x80] sm:$0xf]
        %v294 = vld [vmem:[#allocation5 + $0x84] sm:$0xff]
        %v295 = vld [vmem:[#allocation5 + $0x8c] sm:$0xf]
        %v296 = vld [vmem:[#allocation5 + $0x90] sm:$0xff]
        %v297 = vld [vmem:[#allocation5 + $0x98] sm:$0xf]
        %v298 = vld [vmem:[#allocation5 + $0x9c] sm:$0xff]
        %v299 = vld [vmem:[#allocation5 + $0xa4] sm:$0xf]
        %v300 = vld [vmem:[#allocation5 + $0xa8] sm:$0xff]
        %v301 = vld [vmem:[#allocation5 + $0xb0] sm:$0xf]
        %v302 = vld [vmem:[#allocation5 + $0xb4] sm:$0xff]
        %v303 = vld [vmem:[#allocation5 + $0xbc] sm:$0xf]
        %v304 = vld [vmem:[%s2] sm:$0x7]
        %v306 = vlaneseq
        %v307 = vshrl.u32 %v306, 7
        %v308 = vsub.s32 0, %v307
        %v309 = vrot.slane %v304, %v308
        %v310 = vlaneseq
        %v311 = vshrl.u32 %v310, 7
        %v312 = vsub.s32 1, %v311
        %v313 = vrot.slane %v304, %v312
        %v314 = vlaneseq
        %v315 = vshrl.u32 %v314, 7
        %v316 = vsub.s32 2, %v315
        %v317 = vrot.slane %v304, %v316
        %v353 = vunpack.c.l.b16 %v272
        %v354 = vunpack.c.h.b16 %v272
        %v355 = vunpack.c.l.b16 %v273
        %v356 = vunpack.c.l.b16 %v274
        %v357 = vunpack.c.h.b16 %v274
        %v358 = vunpack.c.l.b16 %v275
        %v359 = vunpack.c.l.b16 %v276
        %v360 = vunpack.c.h.b16 %v276
        %v361 = vunpack.c.l.b16 %v277
        %v362 = vunpack.c.l.b16 %v278
        %v363 = vunpack.c.h.b16 %v278
        %v364 = vunpack.c.l.b16 %v279
        %v365 = vunpack.c.l.b16 %v280
        %v366 = vunpack.c.h.b16 %v280
        %v367 = vunpack.c.l.b16 %v281
        %v368 = vunpack.c.l.b16 %v282
        %v369 = vunpack.c.h.b16 %v282
        %v370 = vunpack.c.l.b16 %v283
        %v371 = vunpack.c.l.b16 %v284
        %v372 = vunpack.c.h.b16 %v284
        %v373 = vunpack.c.l.b16 %v285
        %v374 = vunpack.c.l.b16 %v286
        %v375 = vunpack.c.h.b16 %v286
        %v376 = vunpack.c.l.b16 %v287
        %v377 = vunpack.c.l.b16 %v288
        %v378 = vunpack.c.h.b16 %v288
        %v379 = vunpack.c.l.b16 %v289
        %v380 = vunpack.c.l.b16 %v290
        %v381 = vunpack.c.h.b16 %v290
        %v382 = vunpack.c.l.b16 %v291
        %v383 = vunpack.c.l.b16 %v292
        %v384 = vunpack.c.h.b16 %v292
        %v385 = vunpack.c.l.b16 %v293
        %v386 = vunpack.c.l.b16 %v294
        %v387 = vunpack.c.h.b16 %v294
        %v388 = vunpack.c.l.b16 %v295
        %v389 = vunpack.c.l.b16 %v296
        %v390 = vunpack.c.h.b16 %v296
        %v391 = vunpack.c.l.b16 %v297
        %v392 = vunpack.c.l.b16 %v298
        %v393 = vunpack.c.h.b16 %v298
        %v394 = vunpack.c.l.b16 %v299
        %v395 = vunpack.c.l.b16 %v300
        %v396 = vunpack.c.h.b16 %v300
        %v397 = vunpack.c.l.b16 %v301
        %v398 = vunpack.c.l.b16 %v302
        %v399 = vunpack.c.h.b16 %v302
        %v400 = vunpack.c.l.b16 %v303
        %v401 = vpack.c.b16 %v356, %v353
        %v402 = vpack.c.b16 %v357, %v354
        %v403 = vpack.c.b16 %v358, %v355
        %v404 = vpack.c.b16 %v362, %v359
        %v405 = vpack.c.b16 %v363, %v360
        %v406 = vpack.c.b16 %v364, %v361
        %v407 = vpack.c.b16 %v368, %v365
        %v408 = vpack.c.b16 %v369, %v366
        %v409 = vpack.c.b16 %v370, %v367
        %v410 = vpack.c.b16 %v374, %v371
        %v411 = vpack.c.b16 %v375, %v372
        %v412 = vpack.c.b16 %v376, %v373
        %v413 = vpack.c.b16 %v380, %v377
        %v414 = vpack.c.b16 %v381, %v378
        %v415 = vpack.c.b16 %v382, %v379
        %v416 = vpack.c.b16 %v386, %v383
        %v417 = vpack.c.b16 %v387, %v384
        %v418 = vpack.c.b16 %v388, %v385
        %v419 = vpack.c.b16 %v392, %v389
        %v420 = vpack.c.b16 %v393, %v390
        %v421 = vpack.c.b16 %v394, %v391
        %v422 = vpack.c.b16 %v398, %v395
        %v423 = vpack.c.b16 %v399, %v396
        %v424 = vpack.c.b16 %v400, %v397
        %449 = vmatprep.subr.bf16.mxu0 %v402
        %450 = vmatpush1.bf16.msra.mxu0 %v401
        %451 = vmatprep.subr.bf16.mxu0 %v405
        %452 = vmatpush1.bf16.msra.mxu0 %v404
        %453 = vmatprep.subr.bf16.mxu0 %v408
        %454 = vmatpush1.bf16.msra.mxu0 %v407
        %455 = vmatprep.subr.bf16.mxu0 %v411
        %456 = vmatpush1.bf16.msra.mxu0 %v410
        %457 = vmatprep.subr.bf16.mxu0 %v414
        %458 = vmatpush1.bf16.msra.mxu0 %v413
        %459 = vmatprep.subr.bf16.mxu0 %v417
        %460 = vmatpush1.bf16.msra.mxu0 %v416
        %461 = vmatprep.subr.bf16.mxu0 %v420
        %462 = vmatpush1.bf16.msra.mxu0 %v419
        %463 = vmatprep.subr.bf16.mxu0 %v423
        %464 = vmatpush1.bf16.msra.mxu0 %v422
        %465 = vmatprep.subr.bf16.mxu0 0
        %466 = vmatpush1.bf16.msra.mxu0 0
        %467 = vmatprep.subr.bf16.mxu0 0
        %468 = vmatpush1.bf16.msra.mxu0 0
        %469 = vmatprep.subr.bf16.mxu0 0
        %470 = vmatpush1.bf16.msra.mxu0 0
        %471 = vmatprep.subr.bf16.mxu0 0
        %472 = vmatpush1.bf16.msra.mxu0 0
        %473 = vmatprep.subr.bf16.mxu0 0
        %474 = vmatpush1.bf16.msra.mxu0 0
        %475 = vmatprep.subr.bf16.mxu0 0
        %476 = vmatpush1.bf16.msra.mxu0 0
        %477 = vmatprep.subr.bf16.mxu0 0
        %478 = vmatpush1.bf16.msra.mxu0 0
        %479 = vmatprep.subr.bf16.mxu0 0
        %480 = vmatpush1.bf16.msra.mxu0 0
        %481 = vmatprep.mubr.bf16.mxu0 0
        %482 = vmatmul.mubr.bf16.gmra.mrb[0].mxu0 %v271
        %v483 = vpop.f32.mrb[0].mxu0
        %v484 = vadd.f32 %v309, %v483
        %v485 = vpop.f32.mrb[0].mxu0
        %v486 = vadd.f32 %v313, %v485
        %v487 = vpop.f32.mrb[0].mxu0
        %v488 = vpop.f32.mrb[0].mxu0
        %489 = vdwg.mxu0
        %490 = vmatprep.subr.bf16.mxu0 0
        %491 = vmatpush1.bf16.msra.mxu0 %v403
        %492 = vmatprep.subr.bf16.mxu0 0
        %493 = vmatpush1.bf16.msra.mxu0 %v406
        %494 = vmatprep.subr.bf16.mxu0 0
        %495 = vmatpush1.bf16.msra.mxu0 %v409
        %496 = vmatprep.subr.bf16.mxu0 0
        %497 = vmatpush1.bf16.msra.mxu0 %v412
        %498 = vmatprep.subr.bf16.mxu0 0
        %499 = vmatpush1.bf16.msra.mxu0 %v415
        %500 = vmatprep.subr.bf16.mxu0 0
        %501 = vmatpush1.bf16.msra.mxu0 %v418
        %502 = vmatprep.subr.bf16.mxu0 0
        %503 = vmatpush1.bf16.msra.mxu0 %v421
        %504 = vmatprep.subr.bf16.mxu0 0
        %505 = vmatpush1.bf16.msra.mxu0 %v424
        %506 = vmatprep.subr.bf16.mxu0 0
        %507 = vmatpush1.bf16.msra.mxu0 0
        %508 = vmatprep.subr.bf16.mxu0 0
        %509 = vmatpush1.bf16.msra.mxu0 0
        %510 = vmatprep.subr.bf16.mxu0 0
        %511 = vmatpush1.bf16.msra.mxu0 0
        %512 = vmatprep.subr.bf16.mxu0 0
        %513 = vmatpush1.bf16.msra.mxu0 0
        %514 = vmatprep.subr.bf16.mxu0 0
        %515 = vmatpush1.bf16.msra.mxu0 0
        %516 = vmatprep.subr.bf16.mxu0 0
        %517 = vmatpush1.bf16.msra.mxu0 0
        %518 = vmatprep.subr.bf16.mxu0 0
        %519 = vmatpush1.bf16.msra.mxu0 0
        %520 = vmatprep.subr.bf16.mxu0 0
        %521 = vmatpush1.bf16.msra.mxu0 0
        %522 = vmatprep.mubr.bf16.mxu0 0
        %523 = vmatmul.mubr.bf16.gmra.mrb[0].mxu0 %v271
        %v524 = vpop.f32.mrb[0].mxu0
        %v525 = vadd.f32 %v317, %v524
        %v526 = vpop.f32.mrb[0].mxu0
        %v527 = vpop.f32.mrb[0].mxu0
        %v528 = vpop.f32.mrb[0].mxu0
        %529 = vdwg.mxu0
        %v530 = vxor.u32 %v484, 2147483648
        %v531 = vxor.u32 %v486, 2147483648
        %v532 = vxor.u32 %v525, 2147483648
        %v533 = vmul.f32 %v530, 1.442695
        %v534 = vpow.pop %v533
        %v535 = vmul.f32 %v531, 1.442695
        %v536 = vpow.pop %v535
        %v537 = vmul.f32 %v532, 1.442695
        %v538 = vpow.pop %v537
        %v539 = vadd.f32 %v534, 1.0
        %v540 = vadd.f32 %v536, 1.0
        %v541 = vadd.f32 %v538, 1.0
        %v542 = vrcp.pop %v539
        %v543 = vmul.f32 1.0, %v542
        %v544 = vrcp.pop %v540
        %v545 = vmul.f32 1.0, %v544
        %v546 = vrcp.pop %v541
        %v547 = vmul.f32 1.0, %v546
        %v548 = vmul.f32 %v484, %v543
        %v549 = vmul.f32 %v486, %v545
        %v550 = vmul.f32 %v525, %v547
        %v551 = vpack.c.bf16 %v548, %v548
        %v552 = vpack.c.bf16 %v549, %v549
        %554 = vrot.lane.b32.xlu0 %v551, 64
        %v555 = vpop.permute.xlu0 %554
        %vm556 = vcmask 523264
        %v558 = vsel %vm556, %v551, 0
        %v561 = vsel %vm556, %v555, 0
        %563 = vmatprep.subr.bf16.mxu0 0
        %564 = vmatpush1.bf16.xpose.msra.mxu0 %v561
        %565 = vmatprep.subr.bf16.mxu0 0
        %566 = vmatpush1.bf16.xpose.msra.mxu0 0
        %567 = vmatprep.subr.bf16.mxu0 0
        %568 = vmatpush1.bf16.xpose.msra.mxu0 0
        %569 = vmatprep.subr.bf16.mxu0 0
        %570 = vmatpush1.bf16.xpose.msra.mxu0 0
        %571 = vmatprep.subr.bf16.mxu0 0
        %572 = vmatpush1.bf16.xpose.msra.mxu0 0
        %573 = vmatprep.subr.bf16.mxu0 0
        %574 = vmatpush1.bf16.xpose.msra.mxu0 0
        %575 = vmatprep.subr.bf16.mxu0 0
        %576 = vmatpush1.bf16.xpose.msra.mxu0 0
        %577 = vmatprep.subr.bf16.mxu0 0
        %578 = vmatpush1.bf16.xpose.msra.mxu0 0
        %579 = vmatprep.subr.bf16.mxu0 0
        %580 = vmatpush1.bf16.xpose.msra.mxu0 0
        %581 = vmatprep.subr.bf16.mxu0 0
        %582 = vmatpush1.bf16.xpose.msra.mxu0 0
        %583 = vmatprep.subr.bf16.mxu0 0
        %584 = vmatpush1.bf16.xpose.msra.mxu0 0
        %585 = vmatprep.subr.bf16.mxu0 0
        %586 = vmatpush1.bf16.xpose.msra.mxu0 0
        %587 = vmatprep.subr.bf16.mxu0 0
        %588 = vmatpush1.bf16.xpose.msra.mxu0 0
        %589 = vmatprep.subr.bf16.mxu0 0
        %590 = vmatpush1.bf16.xpose.msra.mxu0 0
        %591 = vmatprep.subr.bf16.mxu0 0
        %592 = vmatpush1.bf16.xpose.msra.mxu0 0
        %593 = vmatprep.subr.bf16.mxu0 0
        %594 = vmatpush1.bf16.xpose.msra.mxu0 0
        %595 = vmatprep.mubr.bf16.mxu0 0
        %596 = vmatmul.mubr.bf16.gmra.mrb[0].mxu0 %v558
        %v597 = vpop.f32.mrb[0].mxu0
        %v598 = vadd.f32 0.0, %v597
        %v599 = vpop.f32.mrb[0].mxu0
        %v600 = vpop.f32.mrb[0].mxu0
        %v601 = vpop.f32.mrb[0].mxu0
        %602 = vdwg.mxu0
        %vm603 = vcmask 64512
        %v604 = vsel %vm603, %v598, -inf
        %605 = vmax.xlane.f32.xlu0 %v604
        %v606 = vpop.xlane.xlu0 %605
        %v607 = vsub.f32 %v598, %v606
        %v608 = vmul.f32 %v607, 1.442695
        %v609 = vpow.pop %v608
        %v610 = vsel %vm603, %v609, 0.0
        %611 = vadd.xlane.f32.xlu0 %v610
        %v612 = vpop.xlane.xlu0 %611
        %v613 = vrcp.pop %v612
        %v614 = vmul.f32 %v609, %v613
        %v615 = vpack.c.bf16 %v614, %v614
        %v617 = vsel %vm603, %v615, 0
        %vm619 = vcmask 1043456
        %v621 = vsel %vm619, %v552, 0
        %623 = vmatprep.subr.bf16.mxu0 0
        %624 = vmatpush1.bf16.msra.mxu0 %v621
        %625 = vmatprep.subr.bf16.mxu0 0
        %626 = vmatpush1.bf16.msra.mxu0 0
        %627 = vmatprep.subr.bf16.mxu0 0
        %628 = vmatpush1.bf16.msra.mxu0 0
        %629 = vmatprep.subr.bf16.mxu0 0
        %630 = vmatpush1.bf16.msra.mxu0 0
        %631 = vmatprep.subr.bf16.mxu0 0
        %632 = vmatpush1.bf16.msra.mxu0 0
        %633 = vmatprep.subr.bf16.mxu0 0
        %634 = vmatpush1.bf16.msra.mxu0 0
        %635 = vmatprep.subr.bf16.mxu0 0
        %636 = vmatpush1.bf16.msra.mxu0 0
        %637 = vmatprep.subr.bf16.mxu0 0
        %638 = vmatpush1.bf16.msra.mxu0 0
        %639 = vmatprep.subr.bf16.mxu0 0
        %640 = vmatpush1.bf16.msra.mxu0 0
        %641 = vmatprep.subr.bf16.mxu0 0
        %642 = vmatpush1.bf16.msra.mxu0 0
        %643 = vmatprep.subr.bf16.mxu0 0
        %644 = vmatpush1.bf16.msra.mxu0 0
        %645 = vmatprep.subr.bf16.mxu0 0
        %646 = vmatpush1.bf16.msra.mxu0 0
        %647 = vmatprep.subr.bf16.mxu0 0
        %648 = vmatpush1.bf16.msra.mxu0 0
        %649 = vmatprep.subr.bf16.mxu0 0
        %650 = vmatpush1.bf16.msra.mxu0 0
        %651 = vmatprep.subr.bf16.mxu0 0
        %652 = vmatpush1.bf16.msra.mxu0 0
        %653 = vmatprep.subr.bf16.mxu0 0
        %654 = vmatpush1.bf16.msra.mxu0 0
        %655 = vmatprep.mubr.bf16.mxu0 0
        %656 = vmatmul.mubr.bf16.gmra.mrb[0].mxu0 %v617
        %v657 = vpop.f32.mrb[0].mxu0
        %v658 = vadd.f32 0.0, %v657
        %v659 = vpop.f32.mrb[0].mxu0
        %v660 = vpop.f32.mrb[0].mxu0
        %v661 = vpop.f32.mrb[0].mxu0
        %662 = vdwg.mxu0
        %v663 = vpack.c.bf16 %v658, %v658
        %v664 = vld [vmem:[#allocation7] sm:$0xf]
        %v665 = vld [vmem:[#allocation7 + $0x4] sm:$0xf]
        %v666 = vld [vmem:[#allocation7 + $0x8] sm:$0xf]
        %v667 = vld [vmem:[#allocation7 + $0xc] sm:$0xf]
        %v668 = vld [vmem:[#allocation7 + $0x10] sm:$0xf]
        %v669 = vld [vmem:[#allocation7 + $0x14] sm:$0xf]
        %v670 = vld [vmem:[#allocation7 + $0x18] sm:$0xf]
        %v671 = vld [vmem:[#allocation7 + $0x1c] sm:$0xf]
        %v672 = vpack.c.bf16 %v550, %v550
        %674 = vrot.lane.b32.xlu0 %v552, 64
        %v675 = vpop.permute.xlu0 %674
        %v677 = vsel %vm556, %v675, 0
        %v680 = vsel %vm556, %v672, 0
        %682 = vmatprep.subr.bf16.mxu0 0
        %683 = vmatpush1.bf16.xpose.msra.mxu0 %v680
        %684 = vmatprep.subr.bf16.mxu0 0
        %685 = vmatpush1.bf16.xpose.msra.mxu0 0
        %686 = vmatprep.subr.bf16.mxu0 0
        %687 = vmatpush1.bf16.xpose.msra.mxu0 0
        %688 = vmatprep.subr.bf16.mxu0 0
        %689 = vmatpush1.bf16.xpose.msra.mxu0 0
        %690 = vmatprep.subr.bf16.mxu0 0
        %691 = vmatpush1.bf16.xpose.msra.mxu0 0
        %692 = vmatprep.subr.bf16.mxu0 0
        %693 = vmatpush1.bf16.xpose.msra.mxu0 0
        %694 = vmatprep.subr.bf16.mxu0 0
        %695 = vmatpush1.bf16.xpose.msra.mxu0 0
        %696 = vmatprep.subr.bf16.mxu0 0
        %697 = vmatpush1.bf16.xpose.msra.mxu0 0
        %698 = vmatprep.subr.bf16.mxu0 0
        %699 = vmatpush1.bf16.xpose.msra.mxu0 0
        %700 = vmatprep.subr.bf16.mxu0 0
        %701 = vmatpush1.bf16.xpose.msra.mxu0 0
        %702 = vmatprep.subr.bf16.mxu0 0
        %703 = vmatpush1.bf16.xpose.msra.mxu0 0
        %704 = vmatprep.subr.bf16.mxu0 0
        %705 = vmatpush1.bf16.xpose.msra.mxu0 0
        %706 = vmatprep.subr.bf16.mxu0 0
        %707 = vmatpush1.bf16.xpose.msra.mxu0 0
        %708 = vmatprep.subr.bf16.mxu0 0
        %709 = vmatpush1.bf16.xpose.msra.mxu0 0
        %710 = vmatprep.subr.bf16.mxu0 0
        %711 = vmatpush1.bf16.xpose.msra.mxu0 0
        %712 = vmatprep.subr.bf16.mxu0 0
        %713 = vmatpush1.bf16.xpose.msra.mxu0 0
        %714 = vmatprep.mubr.bf16.mxu0 0
        %715 = vmatmul.mubr.bf16.gmra.mrb[0].mxu0 %v677
        %v716 = vpop.f32.mrb[0].mxu0
        %v717 = vadd.f32 0.0, %v716
        %v718 = vpop.f32.mrb[0].mxu0
        %v719 = vpop.f32.mrb[0].mxu0
        %v720 = vpop.f32.mrb[0].mxu0
        %721 = vdwg.mxu0
        %v722 = vsel %vm603, %v717, -inf
        %723 = vmax.xlane.f32.xlu0 %v722
        %v724 = vpop.xlane.xlu0 %723
        %v725 = vsub.f32 %v717, %v724
        %v726 = vmul.f32 %v725, 1.442695
        %v727 = vpow.pop %v726
        %v728 = vsel %vm603, %v727, 0.0
        %729 = vadd.xlane.f32.xlu0 %v728
        %v730 = vpop.xlane.xlu0 %729
        %v731 = vrcp.pop %v730
        %v732 = vmul.f32 %v727, %v731
        %v733 = vpack.c.bf16 %v732, %v732
        %735 = vrot.lane.b32.xlu0 %v672, 64
        %v736 = vpop.permute.xlu0 %735
        %v738 = vsel %vm603, %v733, 0
        %v741 = vsel %vm619, %v736, 0
        %743 = vmatprep.subr.bf16.mxu0 0
        %744 = vmatpush1.bf16.msra.mxu0 %v741
        %745 = vmatprep.subr.bf16.mxu0 0
        %746 = vmatpush1.bf16.msra.mxu0 0
        %747 = vmatprep.subr.bf16.mxu0 0
        %748 = vmatpush1.bf16.msra.mxu0 0
        %749 = vmatprep.subr.bf16.mxu0 0
        %750 = vmatpush1.bf16.msra.mxu0 0
        %751 = vmatprep.subr.bf16.mxu0 0
        %752 = vmatpush1.bf16.msra.mxu0 0
        %753 = vmatprep.subr.bf16.mxu0 0
        %754 = vmatpush1.bf16.msra.mxu0 0
        %755 = vmatprep.subr.bf16.mxu0 0
        %756 = vmatpush1.bf16.msra.mxu0 0
        %757 = vmatprep.subr.bf16.mxu0 0
        %758 = vmatpush1.bf16.msra.mxu0 0
        %759 = vmatprep.subr.bf16.mxu0 0
        %760 = vmatpush1.bf16.msra.mxu0 0
        %761 = vmatprep.subr.bf16.mxu0 0
        %762 = vmatpush1.bf16.msra.mxu0 0
        %763 = vmatprep.subr.bf16.mxu0 0
        %764 = vmatpush1.bf16.msra.mxu0 0
        %765 = vmatprep.subr.bf16.mxu0 0
        %766 = vmatpush1.bf16.msra.mxu0 0
        %767 = vmatprep.subr.bf16.mxu0 0
        %768 = vmatpush1.bf16.msra.mxu0 0
        %769 = vmatprep.subr.bf16.mxu0 0
        %770 = vmatpush1.bf16.msra.mxu0 0
        %771 = vmatprep.subr.bf16.mxu0 0
        %772 = vmatpush1.bf16.msra.mxu0 0
        %773 = vmatprep.subr.bf16.mxu0 0
        %774 = vmatpush1.bf16.msra.mxu0 0
        %775 = vmatprep.mubr.bf16.mxu0 0
        %776 = vmatmul.mubr.bf16.gmra.mrb[0].mxu0 %v738
        %v777 = vpop.f32.mrb[0].mxu0
        %v778 = vadd.f32 0.0, %v777
        %v779 = vpop.f32.mrb[0].mxu0
        %v780 = vpop.f32.mrb[0].mxu0
        %v781 = vpop.f32.mrb[0].mxu0
        %782 = vdwg.mxu0
        %v783 = vpack.c.bf16 %v778, %v778
        %v784 = vld [vmem:[#allocation7 + $0x20] sm:$0xf]
        %v785 = vld [vmem:[#allocation7 + $0x24] sm:$0xf]
        %v786 = vld [vmem:[#allocation7 + $0x28] sm:$0xf]
        %v787 = vld [vmem:[#allocation7 + $0x2c] sm:$0xf]
        %v788 = vld [vmem:[#allocation7 + $0x30] sm:$0xf]
        %v789 = vld [vmem:[#allocation7 + $0x34] sm:$0xf]
        %v790 = vld [vmem:[#allocation7 + $0x38] sm:$0xf]
        %v791 = vld [vmem:[#allocation7 + $0x3c] sm:$0xf]
        %v800 = vunpack.c.l.b16 %v784
        %v801 = vunpack.c.l.b16 %v785
        %v802 = vunpack.c.l.b16 %v786
        %v803 = vunpack.c.l.b16 %v787
        %v804 = vunpack.c.l.b16 %v788
        %v805 = vunpack.c.l.b16 %v789
        %v806 = vunpack.c.l.b16 %v790
        %v807 = vunpack.c.l.b16 %v791
        %v808 = vpack.c.b16 %v801, %v800
        %v809 = vpack.c.b16 %v803, %v802
        %v810 = vpack.c.b16 %v805, %v804
        %v811 = vpack.c.b16 %v807, %v806
        %v817 = vsel %vm556, %v783, 0
        %819 = vmatprep.subr.bf16.mxu0 0
        %820 = vmatpush1.bf16.msra.mxu0 %v808
        %821 = vmatprep.subr.bf16.mxu0 0
        %822 = vmatpush1.bf16.msra.mxu0 %v809
        %823 = vmatprep.subr.bf16.mxu0 0
        %824 = vmatpush1.bf16.msra.mxu0 %v810
        %825 = vmatprep.subr.bf16.mxu0 0
        %826 = vmatpush1.bf16.msra.mxu0 %v811
        %827 = vmatprep.subr.bf16.mxu0 0
        %828 = vmatpush1.bf16.msra.mxu0 0
        %829 = vmatprep.subr.bf16.mxu0 0
        %830 = vmatpush1.bf16.msra.mxu0 0
        %831 = vmatprep.subr.bf16.mxu0 0
        %832 = vmatpush1.bf16.msra.mxu0 0
        %833 = vmatprep.subr.bf16.mxu0 0
        %834 = vmatpush1.bf16.msra.mxu0 0
        %835 = vmatprep.subr.bf16.mxu0 0
        %836 = vmatpush1.bf16.msra.mxu0 0
        %837 = vmatprep.subr.bf16.mxu0 0
        %838 = vmatpush1.bf16.msra.mxu0 0
        %839 = vmatprep.subr.bf16.mxu0 0
        %840 = vmatpush1.bf16.msra.mxu0 0
        %841 = vmatprep.subr.bf16.mxu0 0
        %842 = vmatpush1.bf16.msra.mxu0 0
        %843 = vmatprep.subr.bf16.mxu0 0
        %844 = vmatpush1.bf16.msra.mxu0 0
        %845 = vmatprep.subr.bf16.mxu0 0
        %846 = vmatpush1.bf16.msra.mxu0 0
        %847 = vmatprep.subr.bf16.mxu0 0
        %848 = vmatpush1.bf16.msra.mxu0 0
        %849 = vmatprep.subr.bf16.mxu0 0
        %850 = vmatpush1.bf16.msra.mxu0 0
        %851 = vmatprep.mubr.bf16.mxu0 0
        %852 = vmatmul.mubr.bf16.gmra.mrb[0].mxu0 %v817
        %v853 = vpop.f32.mrb[0].mxu0
        %v854 = vadd.f32 0.0, %v853
        %v855 = vpop.f32.mrb[0].mxu0
        %v856 = vpop.f32.mrb[0].mxu0
        %v857 = vpop.f32.mrb[0].mxu0
        %858 = vdwg.mxu0
        %v867 = vunpack.c.l.b16 %v664
        %v868 = vunpack.c.l.b16 %v665
        %v869 = vunpack.c.l.b16 %v666
        %v870 = vunpack.c.l.b16 %v667
        %v871 = vunpack.c.l.b16 %v668
        %v872 = vunpack.c.l.b16 %v669
        %v873 = vunpack.c.l.b16 %v670
        %v874 = vunpack.c.l.b16 %v671
        %v875 = vpack.c.b16 %v868, %v867
        %v876 = vpack.c.b16 %v870, %v869
        %v877 = vpack.c.b16 %v872, %v871
        %v878 = vpack.c.b16 %v874, %v873
        %v884 = vsel %vm556, %v663, 0
        %886 = vmatprep.subr.bf16.mxu0 0
        %887 = vmatpush1.bf16.msra.mxu0 %v875
        %888 = vmatprep.subr.bf16.mxu0 0
        %889 = vmatpush1.bf16.msra.mxu0 %v876
        %890 = vmatprep.subr.bf16.mxu0 0
        %891 = vmatpush1.bf16.msra.mxu0 %v877
        %892 = vmatprep.subr.bf16.mxu0 0
        %893 = vmatpush1.bf16.msra.mxu0 %v878
        %894 = vmatprep.subr.bf16.mxu0 0
        %895 = vmatpush1.bf16.msra.mxu0 0
        %896 = vmatprep.subr.bf16.mxu0 0
        %897 = vmatpush1.bf16.msra.mxu0 0
        %898 = vmatprep.subr.bf16.mxu0 0
        %899 = vmatpush1.bf16.msra.mxu0 0
        %900 = vmatprep.subr.bf16.mxu0 0
        %901 = vmatpush1.bf16.msra.mxu0 0
        %902 = vmatprep.subr.bf16.mxu0 0
        %903 = vmatpush1.bf16.msra.mxu0 0
        %904 = vmatprep.subr.bf16.mxu0 0
        %905 = vmatpush1.bf16.msra.mxu0 0
        %906 = vmatprep.subr.bf16.mxu0 0
        %907 = vmatpush1.bf16.msra.mxu0 0
        %908 = vmatprep.subr.bf16.mxu0 0
        %909 = vmatpush1.bf16.msra.mxu0 0
        %910 = vmatprep.subr.bf16.mxu0 0
        %911 = vmatpush1.bf16.msra.mxu0 0
        %912 = vmatprep.subr.bf16.mxu0 0
        %913 = vmatpush1.bf16.msra.mxu0 0
        %914 = vmatprep.subr.bf16.mxu0 0
        %915 = vmatpush1.bf16.msra.mxu0 0
        %916 = vmatprep.subr.bf16.mxu0 0
        %917 = vmatpush1.bf16.msra.mxu0 0
        %918 = vmatprep.mubr.bf16.mxu0 0
        %919 = vmatmul.mubr.bf16.gmra.mrb[0].mxu0 %v884
        %v920 = vpop.f32.mrb[0].mxu0
        %v921 = vadd.f32 %v854, %v920
        %v922 = vpop.f32.mrb[0].mxu0
        %v923 = vpop.f32.mrb[0].mxu0
        %v924 = vpop.f32.mrb[0].mxu0
        %925 = vdwg.mxu0
        %v926 = vld [vmem:[%s4] sm:$0x1]
        %v928 = vlaneseq
        %v929 = vshrl.u32 %v928, 7
        %v930 = vsub.s32 0, %v929
        %v931 = vrot.slane %v926, %v930
        %v933 = vadd.f32 %v921, %v931
        %v934 = vxor.u32 %v933, 2147483648
        %v935 = vmul.f32 %v934, 1.442695
        %v936 = vpow.pop %v935
        %v937 = vadd.f32 %v936, 1.0
        %v938 = vrcp.pop %v937
        %v939 = vmul.f32 1.0, %v938
        %v940 = vmul.f32 %v933, %v939
        %v941 = vadd.f32 %v940, %v270
        %942 = vadd.xlane.f32.xlu0 %v941
        %v943 = vpop.xlane.xlu0 %942
        %v944 = vmul.f32 %v943, 0.0078125
        %v945 = vmul.f32 %v941, %v941
        %946 = vadd.xlane.f32.xlu0 %v945
        %v947 = vpop.xlane.xlu0 %946
        %v948 = vmul.f32 %v947, 0.0078125
        %v949 = vmul.f32 %v944, %v944
        %v950 = vsub.f32 %v948, %v949
        %v951 = vsub.f32 %v941, %v944
        %v952 = vadd.f32 %v950, 1e-05
        %v953 = vrsqrt.pop %v952
        %v954 = vmul.f32 %v951, %v953
        %955 = vst [vmem:[%s268] sm:$0xff] %v954
        %s956 = sand.u32 %s141, 1
        %s957 = scalar_lea.sflag [#allocation4], %s956
        %s958 = sand.u32 %s141, 1
        %s959 = smul.addr %s958, 8
        %s960 = scalar_lea.vmem [#allocation8], %s959
        // Predicated region
        $region53: #{tpu_custom_call.1} parent=39 // pred_check
          %p961 = pneg %p151
        $region54: #{tpu_custom_call.1} parent=39 // pred_check_branch
          %963 = sbr.rel (%p961) target = $region56
        $region55: #{tpu_custom_call.1} parent=39 // pred_region
          %s965 = ssub.s32 128, 128
          %966 = vsyncadd %s957, %s965
          %s967 = smul.addr %s23, 128
          %s968 = scalar_lea.hbm %s5, %s967
          %s970 = sshll.u32 %s960, 4
          %s971 = int_to_ptr.vmem [resolvable:$true] %s970
          %973 = dma.vmem_to_hbm [thread:$0]  %s971, 128, %s968, %s957
        $region56: #{tpu_custom_call.1} parent=39 // pred_fallthru
          _
      $region40: #{tpu_custom_call.1} parent=5 // pred_fallthru
        _
      %p974 = scmp.le.s32.totalorder 2, %s18
      // Predicated region
      $region57: #{tpu_custom_call.1} parent=5 // pred_check
        %p975 = pneg %p974
      $region58: #{tpu_custom_call.1} parent=5 // pred_check_branch
        %977 = sbr.rel (%p975) target = $region60
      $region59: #{tpu_custom_call.1} parent=5 // pred_region
        %s978 = ssub.s32 %s18, 2
        // Predicated region
        $region61: #{tpu_custom_call.1} parent=59 // pred_check
          %p979 = pneg %p157
        $region62: #{tpu_custom_call.1} parent=59 // pred_check_branch
          %981 = sbr.rel (%p979) target = $region64
        $region63: #{tpu_custom_call.1} parent=59 // pred_region
          %s982 = sand.u32 %s142, 1
          %s983 = scalar_lea.sflag [#allocation4], %s982
          %s984 = sand.u32 %s142, 1
          %s985 = smul.addr %s984, 8
          %s986 = scalar_lea.vmem [#allocation8], %s985
          %987 = dma.done %s983, 128
        $region64: #{tpu_custom_call.1} parent=59 // pred_fallthru
          _
      $region60: #{tpu_custom_call.1} parent=5 // pred_fallthru
        _
    $region6: #{tpu_custom_call.1} parent=1 // loop_footer
      %s22 = sadd.s32 1, %s18
    $region7: #{tpu_custom_call.1} parent=1 // loop_footer_branch
      %17 = sbr.rel target = $region3
    $region8: #{tpu_custom_call.1} parent=1 // loop_exit
      _
    %988 = vsyncpa [#allocation3], 1
    %s989 = scalar_lea.sflag [#allocation3], 1
    %990 = vsyncpa %s989, 1
    %991 = vsyncpa [#allocation6], 1
    %992 = vsyncpa [#allocation4], 1
    %s993 = scalar_lea.sflag [#allocation4], 1
    %994 = vsyncpa %s993, 1

</llo_original>
